<compile_context>
chip_gen: v7x
topology: tpu7x:2x2x1
jax: 0.10.0
libtpu: 0.0.40
codegen_flags: <defaults>
</compile_context>

<pallas_src>
import functools

import jax
import jax.numpy as jnp
from jax.experimental import pallas as pl
from jax.experimental.pallas import tpu as pltpu


LANES = 128                # vreg lane width: last dim of the slab maps to lanes

_BLOCK_ROWS_SAFE = 4096    # 2 MiB/f32 operand tile; 12 MiB double-buffered (fits v5e 16 MiB scoped)
_BLOCK_ROWS_BIG = 8192     # 4 MiB/f32 operand tile; 24 MiB double-buffered (fits v6e/v7x 32 MiB scoped)
                           # Guard: do NOT raise further -- exceeds v7x scoped default / 64 MiB physical.


def _round_up(n, m):
    return ((n + m - 1) // m) * m


def _sublanes_for(dtype):
    # Sublane packing quantum: 8 rows for 4-byte, 16 for 2-byte, 32 for 1-byte dtypes.
    itemsize = jnp.dtype(dtype).itemsize
    return max(8, 32 // max(1, itemsize))


def _default_block_rows():
    """Pick the largest tile that fits the current chip's scoped-VMEM default."""
    try:
        kind = jax.devices()[0].device_kind.lower()
    except Exception:
        return _BLOCK_ROWS_SAFE
    if "v6" in kind or "v7" in kind:     # 32 MiB scoped-VMEM default
        return _BLOCK_ROWS_BIG
    return _BLOCK_ROWS_SAFE              # v5e (16 MiB scoped default) and anything unknown


def _soft_less_than_jnp(x, y, slope):
    """f32-compute fallback for the < 128-element ragged tail / tiny inputs."""
    xf = x.astype(jnp.float32)
    yf = y.astype(jnp.float32)
    return jnp.minimum(slope * jnp.maximum(0.5 / slope + yf - xf, 0.0), 1.0)


def _soft_less_than_kernel(x_ref, y_ref, o_ref, *, slope, half):
    # f(x, y) = min(slope * relu(half + y - x), 1),  half = 0.5 / slope.
    # Compute in f32 (free: kernel is HBM-bound, VPU has slack), cast on store.
    # Lower clamp dropped: slope > 0  =>  slope * relu(...) >= 0.
    x = x_ref[...].astype(jnp.float32)
    y = y_ref[...].astype(jnp.float32)
    z = jnp.maximum(half + y - x, 0.0)
    o_ref[...] = jnp.minimum(slope * z, 1.0).astype(o_ref.dtype)


def soft_less_than(x, y, slope=1.0):
    """Elementwise soft "less than": x, y same shape (any rank), float dtype."""
    assert x.shape == y.shape, "x and y must have the same shape"
    slope = float(slope)              # PyTorch register_buffer value, static here
    assert slope > 0.0, "SoftLessThan requires a strictly positive slope"
    half = 0.5 / slope

    orig_shape = x.shape
    dtype = x.dtype
    total = x.size
    if total == 0:
        return jnp.zeros(orig_shape, dtype)

    xf = x.reshape(-1)
    yf = y.reshape(-1)

    main = (total // LANES) * LANES   # 128-aligned prefix handled by the kernel
    tail = total - main

    if main == 0:
        # Fewer than 128 elements: a kernel launch is pure overhead.
        return _soft_less_than_jnp(xf, yf, slope).astype(dtype).reshape(orig_shape)

    rows = main // LANES
    sublanes = _sublanes_for(dtype)

    if rows <= sublanes:
        block_rows = rows             # full-extent block: always a legal block_shape
    else:
        # >= 2 grid steps so the "parallel" axis splits evenly across both
        # TensorCores on v7x; capped at the VMEM-safe tile for this chip.
        block_rows = min(_default_block_rows(),
                         _round_up(pl.cdiv(rows, 2), sublanes))
    grid = (pl.cdiv(rows, block_rows),)   # Pallas masks the partial last block

    x2 = xf[:main].reshape(rows, LANES)
    y2 = yf[:main].reshape(rows, LANES)

    kernel = functools.partial(_soft_less_than_kernel, slope=slope, half=half)

    out2 = pl.pallas_call(
        kernel,
        out_shape=jax.ShapeDtypeStruct((rows, LANES), dtype),
        grid=grid,
        in_specs=[
            pl.BlockSpec((block_rows, LANES), lambda i: (i, 0)),  # x tile
            pl.BlockSpec((block_rows, LANES), lambda i: (i, 0)),  # y tile
        ],
        out_specs=pl.BlockSpec((block_rows, LANES), lambda i: (i, 0)),
        compiler_params=pltpu.CompilerParams(
            dimension_semantics=("parallel",),
        ),
        cost_estimate=pl.CostEstimate(
            flops=5 * main,
            transcendentals=0,
            bytes_accessed=3 * main * jnp.dtype(dtype).itemsize,
        ),
    )(x2, y2)

    out = out2.reshape(-1)
    if tail:
        # Ragged remainder (< 128 elements): plain jnp instead of padding both
        # inputs + slicing the output (which doubled HBM bytes moved).
        tail_out = _soft_less_than_jnp(xf[main:], yf[main:], slope).astype(dtype)
        out = jnp.concatenate([out, tail_out])
    return out.reshape(orig_shape)


def soft_less_than_ref(x, y, slope=1.0):
    """Pure-JAX reference mirroring the PyTorch forward (f32 compute, cast back)."""
    xf = x.astype(jnp.float32)
    yf = y.astype(jnp.float32)
    res = jnp.clip(slope * jnp.maximum(0.5 / slope + yf - xf, 0.0), 0.0, 1.0)
    return res.astype(x.dtype)


if __name__ == "__main__":
    key = jax.random.PRNGKey(0)
    kx, ky = jax.random.split(key)
    slope = 2.0  # deterministic "buffer" value (module default is 1)

    # NCHW-shaped inputs, consistent with conv-style model usage (128-aligned path).
    x = jax.random.normal(kx, (2, 4, 16, 16), dtype=jnp.float32)
    y = jax.random.normal(ky, (2, 4, 16, 16), dtype=jnp.float32)
    out = jax.block_until_ready(soft_less_than(x, y, slope=slope))
    ref = soft_less_than_ref(x, y, slope=slope)
    assert out.shape == x.shape and out.dtype == x.dtype
    assert jnp.allclose(out, ref, atol=1e-6, rtol=1e-6)

    # Ragged-tail path (399 = 3*128 + 15): kernel on aligned prefix, jnp tail.
    x2 = jax.random.normal(kx, (3, 7, 19), dtype=jnp.float32)
    y2 = jax.random.normal(ky, (3, 7, 19), dtype=jnp.float32)
    out2 = jax.block_until_ready(soft_less_than(x2, y2, slope=slope))
    assert out2.shape == x2.shape and out2.dtype == x2.dtype
    assert jnp.allclose(out2, soft_less_than_ref(x2, y2, slope=slope),
                        atol=1e-6, rtol=1e-6)

    print("KERNEL_OK")
</pallas_src>

<mosaic_0001>
module attributes {stable_mosaic.version = 11 : i64} {
  func.func @_soft_less_than_kernel(%arg0: i32, %arg1: memref<8x128xf32, #tpu.memory_space<vmem>>, %arg2: memref<8x128xf32, #tpu.memory_space<vmem>>, %arg3: memref<8x128xf32, #tpu.memory_space<vmem>>) attributes {dimension_semantics = [#tpu.dimension_semantics<parallel>], iteration_bounds = array<i64: 2>, scalar_prefetch = 0 : i64, scratch_operands = 0 : i64, tpu.core_type = #tpu.core_type<tc>, window_params = [{transform_indices = @transform_0, window_bounds = array<i64: 8, 128>}, {transform_indices = @transform_1, window_bounds = array<i64: 8, 128>}, {transform_indices = @transform_2, window_bounds = array<i64: 8, 128>}]} {
    %c0 = arith.constant 0 : index
    %c0_0 = arith.constant 0 : index
    %0 = vector.load %arg1[%c0, %c0_0] : memref<8x128xf32, #tpu.memory_space<vmem>>, vector<8x128xf32>
    %c0_1 = arith.constant 0 : index
    %c0_2 = arith.constant 0 : index
    %1 = vector.load %arg2[%c0_1, %c0_2] : memref<8x128xf32, #tpu.memory_space<vmem>>, vector<8x128xf32>
    %cst = arith.constant 2.500000e-01 : f32
    %2 = vector.broadcast %cst : f32 to vector<8x128xf32>
    %3 = arith.addf %2, %1 : vector<8x128xf32>
    %4 = arith.subf %3, %0 : vector<8x128xf32>
    %cst_3 = arith.constant 0.000000e+00 : f32
    %5 = vector.broadcast %cst_3 : f32 to vector<8x128xf32>
    %6 = arith.maximumf %4, %5 : vector<8x128xf32>
    %cst_4 = arith.constant 2.000000e+00 : f32
    %7 = vector.broadcast %cst_4 : f32 to vector<8x128xf32>
    %8 = arith.mulf %7, %6 : vector<8x128xf32>
    %cst_5 = arith.constant 1.000000e+00 : f32
    %9 = vector.broadcast %cst_5 : f32 to vector<8x128xf32>
    %10 = arith.minimumf %8, %9 : vector<8x128xf32>
    %c0_6 = arith.constant 0 : index
    %c0_7 = arith.constant 0 : index
    %11 = vector.load %arg3[%c0_6, %c0_7] : memref<8x128xf32, #tpu.memory_space<vmem>>, vector<8x128xf32>
    tpu.vector_store %arg3[%c0_6, %c0_7], %10 {strides = array<i32>} : memref<8x128xf32, #tpu.memory_space<vmem>>, vector<8x128xf32>,
    return
  }
  func.func @transform_0(%arg0: i32) -> (i32, i32) {
    %c0_i32 = arith.constant 0 : i32
    %c0_i32_0 = arith.constant 0 : i32
    return %arg0, %c0_i32 : i32, i32
  }
  func.func @transform_1(%arg0: i32) -> (i32, i32) {
    %c0_i32 = arith.constant 0 : i32
    %c0_i32_0 = arith.constant 0 : i32
    return %arg0, %c0_i32 : i32, i32
  }
  func.func @transform_2(%arg0: i32) -> (i32, i32) {
    %c0_i32 = arith.constant 0 : i32
    %c0_i32_0 = arith.constant 0 : i32
    return %arg0, %c0_i32 : i32, i32
  }
}

</mosaic_0001>

<llo_original>
// kernel: tpu_custom_call.1
$region0: #{tpu_custom_call.1}
  #allocation0 [shape = 'u32[]', space=smem, size = 0x4, offset = 0x4, fixed_abs, tag = 'smem constant byte address 0x4 - core index']
  #allocation1 [shape = 'u32[144,128]{1,0:T(1,128)}', space=vmem, size = 0x12000, scoped, tag = 'internal scratch']
  %s0 = inlined_call_operand.hbm [shape: f32[16,128], index: 0, kind: input, shape index: {}]
  %s1 = inlined_call_operand.hbm [shape: f32[16,128], index: 1, kind: input, shape index: {}]
  %s2 = inlined_call_operand.hbm [shape: f32[16,128], index: 2, kind: output, shape index: {}]
  %s3 = sld [smem:[#allocation0]]
  $region49: #{tpu_custom_call.1} parent=0
    _
  %s5 = ssub.s32 1, %s3
  %s6 = scalar_select 0, %s5, %s3
  $region1: #{tpu_custom_call.1} parent=0
    #allocation2 [shape = 'u8[8192]{0}', space=vmem, size = 0x2000, scoped, tag = 'input window, operand 0']
    #allocation3 [shape = 's32[2]{0}', space=sflag, size = 0x8, scoped, tag = 'scoped memory for tpu_custom_call.1']
    #allocation4 [shape = 's32[2]{0}', space=sflag, size = 0x8, scoped, tag = 'scoped memory for tpu_custom_call.1']
    #allocation5 [shape = 'u8[8192]{0}', space=vmem, size = 0x2000, scoped, tag = 'input window, operand 1']
    #allocation6 [shape = 's32[2]{0}', space=sflag, size = 0x8, scoped, tag = 'scoped memory for tpu_custom_call.1']
    #allocation7 [shape = 'u8[8192]{0}', space=vmem, size = 0x2000, scoped, tag = 'output window, operand 0']
    %7 = vsyncpa [#allocation3], 0
    %s8 = scalar_lea.sflag [#allocation3], 1
    %9 = vsyncpa %s8, 0
    %10 = vsyncpa [#allocation6], 0
    %s11 = scalar_lea.sflag [#allocation6], 1
    %12 = vsyncpa %s11, 0
    %13 = vsyncpa [#allocation4], 0
    %s14 = scalar_lea.sflag [#allocation4], 1
    %15 = vsyncpa %s14, 0
    loop: start=0, step=1, limit=4
    $region2: #{tpu_custom_call.1} parent=1 // loop_pre_header
      _
    $region3: #{tpu_custom_call.1} parent=1 // loop_header
      %s17 = sphi 0, %s21
      %p18 = scmp.ge.s32.totalorder %s17, 4
      %s27 = sphi 0, %s29
      %s30 = sphi 0, %s27
      %s31 = sphi 0, %s30
      %s47 = sphi 0, %s31
      %s53 = sphi 0, %s55
      %s56 = sphi 0, %s53
      %s57 = sphi 0, %s56
      %s73 = sphi 0, %s57
      %s79 = sphi 0, %s81
      %s82 = sphi 0, %s79
      %s83 = sphi 0, %s82
      %s99 = sphi 0, %s83
    $region4: #{tpu_custom_call.1} parent=1 // loop_header_branch
      %20 = sbr.rel (%p18) target = $region8
    $region5: #{tpu_custom_call.1} parent=1 // loop_body
      %s22 = ssub.s32 %s17, 1
      %s23 = ssub.s32 %s17, 2
      %s24 = sadd.s32 %s17, 1
      %s25 = ssub.s32 %s17, %s24
      %p26 = scmp.eq.s32.totalorder %s25, 0
      %s28 = sadd.s32 %s27, 1
      %s29 = scalar_select %p26, %s27, %s28
      %p32 = pneg %p26
      %p33 = scmp.eq.s32.totalorder %s17, 1
      %p34 = por %p32, %p33
      %p35 = scmp.ne.s32.totalorder %s27, %s30
      %p36 = scmp.eq.s32.totalorder %s17, 0
      %p37 = por %p35, %p36
      %p38 = scmp.ne.s32.totalorder %s27, %s30
      %p39 = scmp.eq.s32.totalorder %s22, 1
      %p40 = por %p38, %p39
      %p41 = scmp.ne.s32.totalorder %s30, %s31
      %p42 = scmp.eq.s32.totalorder %s22, 0
      %p43 = por %p41, %p42
      %p44 = scmp.ne.s32.totalorder %s30, %s31
      %p45 = scmp.eq.s32.totalorder %s23, 1
      %p46 = por %p44, %p45
      %p48 = scmp.ne.s32.totalorder %s31, %s47
      %p49 = scmp.eq.s32.totalorder %s23, 0
      %p50 = por %p48, %p49
      %s51 = ssub.s32 %s17, %s24
      %p52 = scmp.eq.s32.totalorder %s51, 0
      %s54 = sadd.s32 %s53, 1
      %s55 = scalar_select %p52, %s53, %s54
      %p58 = pneg %p52
      %p59 = scmp.eq.s32.totalorder %s17, 1
      %p60 = por %p58, %p59
      %p61 = scmp.ne.s32.totalorder %s53, %s56
      %p62 = scmp.eq.s32.totalorder %s17, 0
      %p63 = por %p61, %p62
      %p64 = scmp.ne.s32.totalorder %s53, %s56
      %p65 = scmp.eq.s32.totalorder %s22, 1
      %p66 = por %p64, %p65
      %p67 = scmp.ne.s32.totalorder %s56, %s57
      %p68 = scmp.eq.s32.totalorder %s22, 0
      %p69 = por %p67, %p68
      %p70 = scmp.ne.s32.totalorder %s56, %s57
      %p71 = scmp.eq.s32.totalorder %s23, 1
      %p72 = por %p70, %p71
      %p74 = scmp.ne.s32.totalorder %s57, %s73
      %p75 = scmp.eq.s32.totalorder %s23, 0
      %p76 = por %p74, %p75
      %s77 = ssub.s32 %s17, %s24
      %p78 = scmp.eq.s32.totalorder %s77, 0
      %s80 = sadd.s32 %s79, 1
      %s81 = scalar_select %p78, %s79, %s80
      %p84 = pneg %p78
      %p85 = scmp.eq.s32.totalorder %s17, 1
      %p86 = por %p84, %p85
      %p87 = scmp.ne.s32.totalorder %s79, %s82
      %p88 = scmp.eq.s32.totalorder %s17, 0
      %p89 = por %p87, %p88
      %p90 = scmp.ne.s32.totalorder %s79, %s82
      %p91 = scmp.eq.s32.totalorder %s22, 1
      %p92 = por %p90, %p91
      %p93 = scmp.ne.s32.totalorder %s82, %s83
      %p94 = scmp.eq.s32.totalorder %s22, 0
      %p95 = por %p93, %p94
      %p96 = scmp.ne.s32.totalorder %s82, %s83
      %p97 = scmp.eq.s32.totalorder %s23, 1
      %p98 = por %p96, %p97
      %p100 = scmp.ne.s32.totalorder %s83, %s99
      %p101 = scmp.eq.s32.totalorder %s23, 0
      %p102 = por %p100, %p101
      %p103 = scmp.le.s32.totalorder 1, %s17
      %p104 = scmp.lt.s32.totalorder %s17, 3
      %p105 = pnand %p103, %p104
      %p106 = pneg %p105
      // Predicated region
      $region9: #{tpu_custom_call.1} parent=5 // pred_check
        _
      $region10: #{tpu_custom_call.1} parent=5 // pred_check_branch
        %108 = sbr.rel (%p105) target = $region12
      $region11: #{tpu_custom_call.1} parent=5 // pred_region
        %s109 = ssub.s32 %s17, 1
      $region12: #{tpu_custom_call.1} parent=5 // pred_fallthru
        _
      %p110 = scmp.lt.s32.totalorder %s17, 2
      // Predicated region
      $region13: #{tpu_custom_call.1} parent=5 // pred_check
        %p111 = pneg %p110
      $region14: #{tpu_custom_call.1} parent=5 // pred_check_branch
        %113 = sbr.rel (%p111) target = $region16
      $region15: #{tpu_custom_call.1} parent=5 // pred_region
        // Predicated region
        $region17: #{tpu_custom_call.1} parent=15 // pred_check
          %p114 = pneg %p37
        $region18: #{tpu_custom_call.1} parent=15 // pred_check_branch
          %116 = sbr.rel (%p114) target = $region20
        $region19: #{tpu_custom_call.1} parent=15 // pred_region
          %s117 = sand.u32 %s27, 1
          %s118 = scalar_lea.sflag [#allocation3], %s117
          %s119 = sand.u32 %s27, 1
          %s120 = smul.addr %s119, 8
          %s121 = scalar_lea.vmem [#allocation2], %s120
          %s123 = ssub.s32 128, 128
          %124 = vsyncadd %s118, %s123
          %s125 = smul.addr %s17, 128
          %s126 = scalar_lea.hbm %s0, %s125
          %s128 = sshll.u32 %s121, 4
          %s129 = int_to_ptr.vmem [resolvable:$true] %s128
          %131 = dma.hbm_to_vmem [thread:$0]  %s126, 128, %s129, %s118
        $region20: #{tpu_custom_call.1} parent=15 // pred_fallthru
          _
        // Predicated region
        $region21: #{tpu_custom_call.1} parent=15 // pred_check
          %p132 = pneg %p63
        $region22: #{tpu_custom_call.1} parent=15 // pred_check_branch
          %134 = sbr.rel (%p132) target = $region24
        $region23: #{tpu_custom_call.1} parent=15 // pred_region
          %s135 = sand.u32 %s53, 1
          %s136 = scalar_lea.sflag [#allocation6], %s135
          %s137 = sand.u32 %s53, 1
          %s138 = smul.addr %s137, 8
          %s139 = scalar_lea.vmem [#allocation5], %s138
          %s141 = ssub.s32 128, 128
          %142 = vsyncadd %s136, %s141
          %s143 = smul.addr %s17, 128
          %s144 = scalar_lea.hbm %s1, %s143
          %s146 = sshll.u32 %s139, 4
          %s147 = int_to_ptr.vmem [resolvable:$true] %s146
          %149 = dma.hbm_to_vmem [thread:$0]  %s144, 128, %s147, %s136
        $region24: #{tpu_custom_call.1} parent=15 // pred_fallthru
          _
      $region16: #{tpu_custom_call.1} parent=5 // pred_fallthru
        _
      %p150 = scmp.le.s32.totalorder 1, %s17
      %p151 = scmp.lt.s32.totalorder %s17, 3
      %p152 = pnand %p150, %p151
      %p153 = pneg %p152
      // Predicated region
      $region25: #{tpu_custom_call.1} parent=5 // pred_check
        _
      $region26: #{tpu_custom_call.1} parent=5 // pred_check_branch
        %155 = sbr.rel (%p152) target = $region28
      $region27: #{tpu_custom_call.1} parent=5 // pred_region
        %s156 = ssub.s32 %s17, 1
        %s157 = sand.u32 %s30, 1
        %s158 = scalar_lea.sflag [#allocation3], %s157
        %s159 = sand.u32 %s30, 1
        %s160 = smul.addr %s159, 8
        %s161 = scalar_lea.vmem [#allocation2], %s160
        // Predicated region
        $region29: #{tpu_custom_call.1} parent=27 // pred_check
          %p162 = pneg %p43
        $region30: #{tpu_custom_call.1} parent=27 // pred_check_branch
          %164 = sbr.rel (%p162) target = $region32
        $region31: #{tpu_custom_call.1} parent=27 // pred_region
          %165 = dma.done %s158, 128
        $region32: #{tpu_custom_call.1} parent=27 // pred_fallthru
          _
        %s166 = sand.u32 %s56, 1
        %s167 = scalar_lea.sflag [#allocation6], %s166
        %s168 = sand.u32 %s56, 1
        %s169 = smul.addr %s168, 8
        %s170 = scalar_lea.vmem [#allocation5], %s169
        // Predicated region
        $region33: #{tpu_custom_call.1} parent=27 // pred_check
          %p171 = pneg %p69
        $region34: #{tpu_custom_call.1} parent=27 // pred_check_branch
          %173 = sbr.rel (%p171) target = $region36
        $region35: #{tpu_custom_call.1} parent=27 // pred_region
          %174 = dma.done %s167, 128
        $region36: #{tpu_custom_call.1} parent=27 // pred_fallthru
          _
        %s175 = sand.u32 %s30, 1
        %s176 = scalar_lea.sflag [#allocation3], %s175
        %s177 = sand.u32 %s30, 1
        %s178 = smul.addr %s177, 8
        %s179 = scalar_lea.vmem [#allocation2], %s178
        %p180 = pneg %p43
        %p181 = pneg %p40
        %s182 = sand.u32 %s56, 1
        %s183 = scalar_lea.sflag [#allocation6], %s182
        %s184 = sand.u32 %s56, 1
        %s185 = smul.addr %s184, 8
        %s186 = scalar_lea.vmem [#allocation5], %s185
        %p187 = pneg %p69
        %p188 = pneg %p66
        %p189 = pneg %p95
        %p190 = pneg %p92
        %s191 = sand.u32 %s82, 1
        %s192 = scalar_lea.sflag [#allocation4], %s191
        %s193 = sand.u32 %s82, 1
        %s194 = smul.addr %s193, 8
        %s195 = scalar_lea.vmem [#allocation7], %s194
        %v196 = vld [vmem:[%s161] sm:$0xff]
        %v197 = vld [vmem:[%s170] sm:$0xff]
        %v198 = vadd.f32 %v197, 0.25
        %v199 = vsub.f32 %v198, %v196
        %v200 = vmax.f32 %v199, 0.0
        %v201 = vmul.f32 %v200, 2.0
        %v202 = vmin.f32 %v201, 1.0
        %203 = vst [vmem:[%s195] sm:$0xff] %v202
        %s204 = sand.u32 %s82, 1
        %s205 = scalar_lea.sflag [#allocation4], %s204
        %s206 = sand.u32 %s82, 1
        %s207 = smul.addr %s206, 8
        %s208 = scalar_lea.vmem [#allocation7], %s207
        // Predicated region
        $region37: #{tpu_custom_call.1} parent=27 // pred_check
          %p209 = pneg %p92
        $region38: #{tpu_custom_call.1} parent=27 // pred_check_branch
          %211 = sbr.rel (%p209) target = $region40
        $region39: #{tpu_custom_call.1} parent=27 // pred_region
          %s213 = ssub.s32 128, 128
          %214 = vsyncadd %s205, %s213
          %s215 = smul.addr %s22, 128
          %s216 = scalar_lea.hbm %s2, %s215
          %s218 = sshll.u32 %s208, 4
          %s219 = int_to_ptr.vmem [resolvable:$true] %s218
          %221 = dma.vmem_to_hbm [thread:$0]  %s219, 128, %s216, %s205
        $region40: #{tpu_custom_call.1} parent=27 // pred_fallthru
          _
      $region28: #{tpu_custom_call.1} parent=5 // pred_fallthru
        _
      %p222 = scmp.le.s32.totalorder 2, %s17
      // Predicated region
      $region41: #{tpu_custom_call.1} parent=5 // pred_check
        %p223 = pneg %p222
      $region42: #{tpu_custom_call.1} parent=5 // pred_check_branch
        %225 = sbr.rel (%p223) target = $region44
      $region43: #{tpu_custom_call.1} parent=5 // pred_region
        %s226 = ssub.s32 %s17, 2
        // Predicated region
        $region45: #{tpu_custom_call.1} parent=43 // pred_check
          %p227 = pneg %p98
        $region46: #{tpu_custom_call.1} parent=43 // pred_check_branch
          %229 = sbr.rel (%p227) target = $region48
        $region47: #{tpu_custom_call.1} parent=43 // pred_region
          %s230 = sand.u32 %s83, 1
          %s231 = scalar_lea.sflag [#allocation4], %s230
          %s232 = sand.u32 %s83, 1
          %s233 = smul.addr %s232, 8
          %s234 = scalar_lea.vmem [#allocation7], %s233
          %235 = dma.done %s231, 128
        $region48: #{tpu_custom_call.1} parent=43 // pred_fallthru
          _
      $region44: #{tpu_custom_call.1} parent=5 // pred_fallthru
        _
    $region6: #{tpu_custom_call.1} parent=1 // loop_footer
      %s21 = sadd.s32 1, %s17
    $region7: #{tpu_custom_call.1} parent=1 // loop_footer_branch
      %16 = sbr.rel target = $region3
    $region8: #{tpu_custom_call.1} parent=1 // loop_exit
      _
    %236 = vsyncpa [#allocation3], 1
    %s237 = scalar_lea.sflag [#allocation3], 1
    %238 = vsyncpa %s237, 1
    %239 = vsyncpa [#allocation6], 1
    %s240 = scalar_lea.sflag [#allocation6], 1
    %241 = vsyncpa %s240, 1
    %242 = vsyncpa [#allocation4], 1
    %s243 = scalar_lea.sflag [#allocation4], 1
    %244 = vsyncpa %s243, 1

</llo_original>
